<compile_context>
chip_gen: v7x
topology: tpu7x:2x2x1
jax: 0.10.0
libtpu: 0.0.40
codegen_flags: <defaults>
</compile_context>

<pallas_src>
import numpy as np
import jax
import jax.numpy as jnp
from jax.experimental import pallas as pl
from jax.experimental.pallas import tpu as pltpu

# ----- hyperparameters mirroring Limited.__init__'s `param` dict -------------
MATRIX_SIZE = (16, 16)          # param['matrix_size']  -> (H, W)
NUM_LAYERS = 2                  # param['num_layers']   (<= 3; 2nd layer set used)
POOL = 2                        # param['maxpool_kernel_size']
K = 4                           # param['conv_kernel_num']
DENSED = 32                     # param['densed_size']
N_CLASS = 2
B = 2                           # demo batch

H, W = MATRIX_SIZE
KW1 = H // (POOL ** NUM_LAYERS)          # convHor1 kernel width  = 4
KH1 = W // (POOL ** NUM_LAYERS)          # convVer1 kernel height = 4
L1 = W // POOL                           # per-channel length after layer-1 pool = 8
L2_FULL = L1 - KW1 + 1                   # layer-2 conv output length = 5
L2_KEEP = POOL * (L2_FULL // POOL)       # positions that survive floor pooling = 4
L2_POOLED = L2_FULL // POOL              # = 2
FLAT = 2 * K * L2_POOLED                 # dense input features = 16
assert POOL == 2, "half/half pooling layout requires maxpool_kernel_size == 2"
assert 2 * K * W == 128                  # layer-1 fused output exactly fills 128 lanes
# TODO(synk): num_layers == 3 branch (convHor2/convVer2) is not exercised with
# NUM_LAYERS=2; it is the same pattern as layer set 2 and omitted here.

# --- packed-parameter row offsets (single (P_ROWS, 128) f32 buffer) -----------
R_W1 = 0                      # (H*W, 128)           fused layer-1 weights
R_W2 = R_W1 + H * W           # (2*K*L1, 2*K*L2_KEEP) fused layer-2 weights (lane-padded)
R_WD = R_W2 + 2 * K * L1      # (FLAT, DENSED)
R_WO = R_WD + FLAT            # (DENSED, N_CLASS)
R_B1 = R_WO + DENSED          # 1 row each for the biases
R_B2 = R_B1 + 1
R_BD = R_B2 + 1
R_BO = R_BD + 1
_P_ROWS_RAW = R_BO + 1        # 372
P_ROWS = (_P_ROWS_RAW + 7) // 8 * 8      # 376 (sublane aligned)


def limited_kernel(x_ref, p_ref, out_ref):
    x = x_ref[...]                                                   # (TB, H*W)

    # ---- layer set 1: convHor + convVer + biases as ONE matmul --------------
    # column layout: [t0 even | t1 even | t0 odd | t1 odd]  (each K*L1 wide)
    w1 = p_ref[R_W1:R_W1 + H * W, :]                                 # (256, 128)
    y1 = jnp.dot(x, w1, preferred_element_type=jnp.float32)
    y1 = jnp.maximum(y1 + p_ref[R_B1:R_B1 + 1, :], 0.0)              # relu(conv+bias)
    p1 = jnp.maximum(y1[:, :2 * K * L1], y1[:, 2 * K * L1:])         # max-pool -> (TB, 64)

    # ---- layer set 2: convHor1 + convVer1 as ONE matmul ---------------------
    # only the L2_KEEP positions that survive pooling are produced (floor mode)
    w2 = p_ref[R_W2:R_W2 + 2 * K * L1, 0:2 * K * L2_KEEP]            # (64, 32)
    y2 = jnp.dot(p1, w2, preferred_element_type=jnp.float32)
    y2 = jnp.maximum(y2 + p_ref[R_B2:R_B2 + 1, 0:2 * K * L2_KEEP], 0.0)
    p2 = jnp.maximum(y2[:, :FLAT], y2[:, FLAT:2 * K * L2_KEEP])      # (TB, 16) == cat(f0, f1)

    # ---- dense + relu --------------------------------------------------------
    wd = p_ref[R_WD:R_WD + FLAT, 0:DENSED]                           # (16, 32)
    d = jnp.dot(p2, wd, preferred_element_type=jnp.float32)
    d = jnp.maximum(d + p_ref[R_BD:R_BD + 1, 0:DENSED], 0.0)         # (TB, 32)

    # ---- decision + softmax(dim=1) -------------------------------------------
    wo = p_ref[R_WO:R_WO + DENSED, 0:N_CLASS]                        # (32, 2)
    logits = jnp.dot(d, wo, preferred_element_type=jnp.float32)
    logits = logits + p_ref[R_BO:R_BO + 1, 0:N_CLASS]
    m = jnp.max(logits, axis=1, keepdims=True)
    e = jnp.exp(logits - m)
    out_ref[...] = e * pl.reciprocal(jnp.sum(e, axis=1, keepdims=True), approx=True)


def _pack_params(p):
    """Fold every module parameter into one (P_ROWS, 128) f32 buffer.

    W1 columns (pool-friendly):  col = (pos % 2)*(2*K*L1) + part*(K*L1) + k*L1 + pos//2
      part 0 = convHor branch (t0, pos = w, contraction over h)
      part 1 = convVer branch (t1, pos = h, contraction over w)
    so max(first 64 lanes, last 64 lanes) == the layer-1 max-pool, and the
    pooled layout (k*L1 + pooled_pos) is exactly what W2's rows expect.
    W2 columns use the analogous layout over the L2_KEEP surviving positions,
    so max(first 16, last 16) yields cat(flatten(t0), flatten(t1)) directly.
    """
    KL1 = K * L1
    KL2 = K * L2_POOLED

    # ----- W1 : (H*W, 128) ----------------------------------------------------
    k_i, h_i, w_i = np.meshgrid(np.arange(K), np.arange(H), np.arange(W), indexing='ij')
    rows1 = (h_i * W + w_i).ravel()
    cols1_t0 = ((w_i % 2) * (2 * KL1) + k_i * L1 + w_i // 2).ravel()
    vals1_t0 = jnp.broadcast_to(p['wh'][:, :, None], (K, H, W)).ravel()
    cols1_t1 = ((h_i % 2) * (2 * KL1) + KL1 + k_i * L1 + h_i // 2).ravel()
    vals1_t1 = jnp.broadcast_to(p['wv'][:, None, :], (K, H, W)).ravel()
    W1 = jnp.zeros((H * W, 128), jnp.float32)
    W1 = W1.at[rows1, cols1_t0].add(vals1_t0).at[rows1, cols1_t1].add(vals1_t1)
    b1 = jnp.concatenate([jnp.repeat(p['bh'], L1), jnp.repeat(p['bv'], L1)] * 2)   # (128,)

    # ----- W2 : (2*K*L1, 2*K*L2_KEEP) -----------------------------------------
    o0, i0, t0, j0 = np.meshgrid(np.arange(K), np.arange(K),
                                 np.arange(KW1), np.arange(L2_KEEP), indexing='ij')
    rows2_t0 = (i0 * L1 + j0 + t0).ravel()
    cols2_t0 = ((j0 % 2) * (2 * KL2) + o0 * L2_POOLED + j0 // 2).ravel()
    vals2_t0 = jnp.broadcast_to(p['wh1'][:, :, :, None], (K, K, KW1, L2_KEEP)).ravel()
    o1, i1, t1, j1 = np.meshgrid(np.arange(K), np.arange(K),
                                 np.arange(KH1), np.arange(L2_KEEP), indexing='ij')
    rows2_t1 = (KL1 + i1 * L1 + j1 + t1).ravel()
    cols2_t1 = ((j1 % 2) * (2 * KL2) + KL2 + o1 * L2_POOLED + j1 // 2).ravel()
    vals2_t1 = jnp.broadcast_to(p['wv1'][:, :, :, None], (K, K, KH1, L2_KEEP)).ravel()
    W2 = jnp.zeros((2 * KL1, 2 * K * L2_KEEP), jnp.float32)
    W2 = W2.at[rows2_t0, cols2_t0].add(vals2_t0).at[rows2_t1, cols2_t1].add(vals2_t1)
    b2 = jnp.concatenate([jnp.repeat(p['bh1'], L2_POOLED),
                          jnp.repeat(p['bv1'], L2_POOLED)] * 2)                     # (32,)

    def pad_lanes(a):
        return jnp.pad(a, ((0, 0), (0, 128 - a.shape[-1])))

    packed = jnp.concatenate([
        W1,                                             # rows R_W1 ..
        pad_lanes(W2),                                  # rows R_W2 ..
        pad_lanes(p['wd'].astype(jnp.float32)),         # rows R_WD ..
        pad_lanes(p['wo'].astype(jnp.float32)),         # rows R_WO ..
        b1[None, :],                                    # row  R_B1
        pad_lanes(b2[None, :]),                         # row  R_B2
        pad_lanes(p['bd'].astype(jnp.float32)[None, :]),# row  R_BD
        pad_lanes(p['bo'].astype(jnp.float32)[None, :]),# row  R_BO
    ], axis=0)
    packed = jnp.pad(packed, ((0, P_ROWS - _P_ROWS_RAW), (0, 0)))
    return packed


def _round_up(n, m):
    return (n + m - 1) // m * m


def limited_forward(x_in, params, *, batch_tile=128):
    """x_in: (B, 1, H, W) or (B, 1, H*W) — mirrors Limited.reshape()."""
    nb = x_in.shape[0]
    x = x_in.reshape(nb, H * W).astype(jnp.float32)
    packed = _pack_params(params)                       # single parameter buffer

    tb = batch_tile if nb >= batch_tile else _round_up(max(nb, 1), 8)
    nb_pad = _round_up(nb, tb)
    if nb_pad != nb:
        x = jnp.pad(x, ((0, nb_pad - nb), (0, 0)))      # padded rows discarded below

    out = pl.pallas_call(
        limited_kernel,
        out_shape=jax.ShapeDtypeStruct((nb_pad, N_CLASS), jnp.float32),
        grid=(nb_pad // tb,),
        in_specs=[
            pl.BlockSpec((tb, H * W), lambda i: (i, 0)),     # batch tile of x
            pl.BlockSpec((P_ROWS, 128), lambda i: (0, 0)),   # packed params (resident)
        ],
        out_specs=pl.BlockSpec((tb, N_CLASS), lambda i: (i, 0)),
        compiler_params=pltpu.CompilerParams(
            dimension_semantics=("parallel",)),              # shard batch across TCs (v7x)
    )(x, packed)
    return out[:nb]


# ---------------- pure-JAX reference (true conv/pool semantics) ---------------
def reference_forward(x_nchw, params):
    x = x_nchw.reshape(x_nchw.shape[0], 1, H, W).astype(jnp.float32)
    hp = jax.lax.Precision.HIGHEST

    def conv(z, w, b):
        y = jax.lax.conv_general_dilated(
            z, w, (1, 1), 'VALID',
            dimension_numbers=('NCHW', 'OIHW', 'NCHW'), precision=hp)
        return y + b.reshape(1, -1, 1, 1)

    def maxpool(z, kh, kw):
        return jax.lax.reduce_window(z, -jnp.inf, jax.lax.max,
                                     (1, 1, kh, kw), (1, 1, kh, kw), 'VALID')

    relu = lambda z: jnp.maximum(z, 0.0)
    w_hor = params['wh'].reshape(K, 1, H, 1)
    w_ver = params['wv'].reshape(K, 1, 1, W)
    w_hor1 = params['wh1'].reshape(K, K, 1, KW1)
    w_ver1 = params['wv1'].reshape(K, K, KH1, 1)

    t0 = maxpool(relu(conv(x, w_hor, params['bh'])), 1, POOL)
    t1 = maxpool(relu(conv(x, w_ver, params['bv'])), POOL, 1)
    t0 = maxpool(relu(conv(t0, w_hor1, params['bh1'])), 1, POOL)
    t1 = maxpool(relu(conv(t1, w_ver1, params['bv1'])), POOL, 1)
    cat = jnp.concatenate([t0.reshape(t0.shape[0], -1),
                           t1.reshape(t1.shape[0], -1)], axis=1)
    d = relu(jnp.dot(cat, params['wd'], precision=hp) + params['bd'])
    return jax.nn.softmax(jnp.dot(d, params['wo'], precision=hp) + params['bo'], axis=1)


def init_params(key):
    ks = jax.random.split(key, 12)
    flat_feats = K * ((W // POOL - KW1 + 1) // POOL) + K * ((H // POOL - KH1 + 1) // POOL)
    s = 0.1
    return {
        'wh':  s * jax.random.normal(ks[0], (K, H), jnp.float32),
        'bh':  s * jax.random.normal(ks[1], (K,), jnp.float32),
        'wv':  s * jax.random.normal(ks[2], (K, W), jnp.float32),
        'bv':  s * jax.random.normal(ks[3], (K,), jnp.float32),
        'wh1': s * jax.random.normal(ks[4], (K, K, KW1), jnp.float32),
        'bh1': s * jax.random.normal(ks[5], (K,), jnp.float32),
        'wv1': s * jax.random.normal(ks[6], (K, K, KH1), jnp.float32),
        'bv1': s * jax.random.normal(ks[7], (K,), jnp.float32),
        'wd':  s * jax.random.normal(ks[8], (flat_feats, DENSED), jnp.float32),
        'bd':  s * jax.random.normal(ks[9], (DENSED,), jnp.float32),
        'wo':  s * jax.random.normal(ks[10], (DENSED, N_CLASS), jnp.float32),
        'bo':  s * jax.random.normal(ks[11], (N_CLASS,), jnp.float32),
    }


if __name__ == "__main__":
    key = jax.random.PRNGKey(0)
    kx, kp, kx2 = jax.random.split(key, 3)
    params = init_params(kp)
    fwd = jax.jit(limited_forward)

    # small batch (module's typical usage): PyTorch-style NCHW input (B, 1, H, W)
    x = jax.random.normal(kx, (B, 1, H, W), jnp.float32)
    out = jax.block_until_ready(fwd(x, params))
    ref = reference_forward(x, params)
    assert out.shape == (B, N_CLASS)
    # tolerance accounts for the approx (EUP) reciprocal in the softmax
    assert jnp.allclose(out, ref, atol=2e-3, rtol=2e-3), (out, ref)
    assert jnp.allclose(jnp.sum(out, axis=1), 1.0, atol=2e-3)

    # larger, non-tile-aligned batch: exercises padding + multi-tile parallel grid
    B2 = 300
    x2 = jax.random.normal(kx2, (B2, 1, H, W), jnp.float32)
    out2 = jax.block_until_ready(fwd(x2, params))
    ref2 = reference_forward(x2, params)
    assert out2.shape == (B2, N_CLASS)
    assert jnp.allclose(out2, ref2, atol=2e-3, rtol=2e-3)

    print("KERNEL_OK")
</pallas_src>

<mosaic_0001>
module attributes {stable_mosaic.version = 11 : i64} {
  func.func private @main(%arg0: i32) attributes {dimension_semantics = [#tpu.dimension_semantics<core_parallel>], iteration_bounds = array<i64: 2>, tpu.core_type = #tpu.core_type<sc_scalar_subcore>, window_params = []} {
    return
  }
}

module attributes {stable_mosaic.version = 11 : i64} {
  func.func private @main(%arg0: i32) attributes {dimension_semantics = [#tpu.dimension_semantics<core_parallel>], iteration_bounds = array<i64: 2>, tpu.core_type = #tpu.core_type<sc_scalar_subcore>, window_params = []} {
    return
  }
}

module attributes {stable_mosaic.version = 11 : i64} {
  func.func @limited_kernel(%arg0: i32, %arg1: memref<8x256xf32, #tpu.memory_space<vmem>>, %arg2: memref<376x128xf32, #tpu.memory_space<vmem>>, %arg3: memref<8x2xf32, #tpu.memory_space<vmem>>) attributes {dimension_semantics = [#tpu.dimension_semantics<parallel>], iteration_bounds = array<i64: 1>, scalar_prefetch = 0 : i64, scratch_operands = 0 : i64, tpu.core_type = #tpu.core_type<tc>, window_params = [{transform_indices = @transform_0, window_bounds = array<i64: 8, 256>}, {pipeline_mode = #tpu.pipeline_mode<synchronous>, transform_indices = @transform_1, window_bounds = array<i64: 376, 128>}, {transform_indices = @transform_2, window_bounds = array<i64: 8, 2>}]} {
    %c0 = arith.constant 0 : index
    %c0_0 = arith.constant 0 : index
    %0 = vector.load %arg1[%c0, %c0_0] : memref<8x256xf32, #tpu.memory_space<vmem>>, vector<8x256xf32>
    %c0_1 = arith.constant 0 : index
    %c0_2 = arith.constant 0 : index
    %1 = vector.load %arg2[%c0_1, %c0_2] : memref<376x128xf32, #tpu.memory_space<vmem>>, vector<256x128xf32>
    %cst = arith.constant dense<0.000000e+00> : vector<8x128xf32>
    %2 = tpu.matmul %0, %1, %cst {dimension_numbers = #tpu.dot_dimension_numbers<[1], [0], [0], [1], [0, 0, 1, 1], [], []>} : vector<8x256xf32>, vector<256x128xf32>, vector<8x128xf32> -> vector<8x128xf32>
    %c368 = arith.constant 368 : index
    %c0_3 = arith.constant 0 : index
    %3 = vector.load %arg2[%c368, %c0_3] : memref<376x128xf32, #tpu.memory_space<vmem>>, vector<1x128xf32>
    %4 = vector.broadcast %3 : vector<1x128xf32> to vector<8x128xf32>
    %5 = arith.addf %2, %4 : vector<8x128xf32>
    %cst_4 = arith.constant 0.000000e+00 : f32
    %6 = vector.broadcast %cst_4 : f32 to vector<8x128xf32>
    %7 = arith.maximumf %5, %6 : vector<8x128xf32>
    %8 = vector.extract_strided_slice %7 {offsets = [0, 0], sizes = [8, 64], strides = [1, 1]} : vector<8x128xf32> to vector<8x64xf32>
    %9 = vector.extract_strided_slice %7 {offsets = [0, 64], sizes = [8, 64], strides = [1, 1]} : vector<8x128xf32> to vector<8x64xf32>
    %10 = arith.maximumf %8, %9 : vector<8x64xf32>
    %c256 = arith.constant 256 : index
    %c0_5 = arith.constant 0 : index
    %11 = vector.load %arg2[%c256, %c0_5] : memref<376x128xf32, #tpu.memory_space<vmem>>, vector<64x32xf32>
    %cst_6 = arith.constant dense<0.000000e+00> : vector<8x32xf32>
    %12 = tpu.matmul %10, %11, %cst_6 {dimension_numbers = #tpu.dot_dimension_numbers<[1], [0], [0], [1], [0, 0, 1, 1], [], []>} : vector<8x64xf32>, vector<64x32xf32>, vector<8x32xf32> -> vector<8x32xf32>
    %c369 = arith.constant 369 : index
    %c0_7 = arith.constant 0 : index
    %13 = vector.load %arg2[%c369, %c0_7] : memref<376x128xf32, #tpu.memory_space<vmem>>, vector<1x32xf32>
    %14 = vector.broadcast %13 : vector<1x32xf32> to vector<8x32xf32>
    %15 = arith.addf %12, %14 : vector<8x32xf32>
    %cst_8 = arith.constant 0.000000e+00 : f32
    %16 = vector.broadcast %cst_8 : f32 to vector<8x32xf32>
    %17 = arith.maximumf %15, %16 : vector<8x32xf32>
    %18 = vector.extract_strided_slice %17 {offsets = [0, 0], sizes = [8, 16], strides = [1, 1]} : vector<8x32xf32> to vector<8x16xf32>
    %19 = vector.extract_strided_slice %17 {offsets = [0, 16], sizes = [8, 16], strides = [1, 1]} : vector<8x32xf32> to vector<8x16xf32>
    %20 = arith.maximumf %18, %19 : vector<8x16xf32>
    %c320 = arith.constant 320 : index
    %c0_9 = arith.constant 0 : index
    %21 = vector.load %arg2[%c320, %c0_9] : memref<376x128xf32, #tpu.memory_space<vmem>>, vector<16x32xf32>
    %cst_10 = arith.constant dense<0.000000e+00> : vector<8x32xf32>
    %22 = tpu.matmul %20, %21, %cst_10 {dimension_numbers = #tpu.dot_dimension_numbers<[1], [0], [0], [1], [0, 0, 1, 1], [], []>} : vector<8x16xf32>, vector<16x32xf32>, vector<8x32xf32> -> vector<8x32xf32>
    %c370 = arith.constant 370 : index
    %c0_11 = arith.constant 0 : index
    %23 = vector.load %arg2[%c370, %c0_11] : memref<376x128xf32, #tpu.memory_space<vmem>>, vector<1x32xf32>
    %24 = vector.broadcast %23 : vector<1x32xf32> to vector<8x32xf32>
    %25 = arith.addf %22, %24 : vector<8x32xf32>
    %cst_12 = arith.constant 0.000000e+00 : f32
    %26 = vector.broadcast %cst_12 : f32 to vector<8x32xf32>
    %27 = arith.maximumf %25, %26 : vector<8x32xf32>
    %c336 = arith.constant 336 : index
    %c0_13 = arith.constant 0 : index
    %28 = vector.load %arg2[%c336, %c0_13] : memref<376x128xf32, #tpu.memory_space<vmem>>, vector<32x2xf32>
    %cst_14 = arith.constant dense<0.000000e+00> : vector<8x2xf32>
    %29 = tpu.matmul %27, %28, %cst_14 {dimension_numbers = #tpu.dot_dimension_numbers<[1], [0], [0], [1], [0, 0, 1, 1], [], []>} : vector<8x32xf32>, vector<32x2xf32>, vector<8x2xf32> -> vector<8x2xf32>
    %c371 = arith.constant 371 : index
    %c0_15 = arith.constant 0 : index
    %30 = vector.load %arg2[%c371, %c0_15] : memref<376x128xf32, #tpu.memory_space<vmem>>, vector<1x2xf32>
    %31 = vector.broadcast %30 : vector<1x2xf32> to vector<8x2xf32>
    %32 = arith.addf %29, %31 : vector<8x2xf32>
    %cst_16 = arith.constant dense<0xFF800000> : vector<8xf32>
    %33 = vector.multi_reduction <maximumf>, %32, %cst_16 [1] : vector<8x2xf32> to vector<8xf32>
    %34 = vector.shape_cast %33 : vector<8xf32> to vector<8x1xf32>
    %35 = vector.broadcast %34 : vector<8x1xf32> to vector<8x2xf32>
    %36 = arith.subf %32, %35 : vector<8x2xf32>
    %37 = math.exp %36 : vector<8x2xf32>
    %cst_17 = arith.constant dense<0.000000e+00> : vector<8xf32>
    %38 = vector.multi_reduction <add>, %37, %cst_17 [1] : vector<8x2xf32> to vector<8xf32>
    %39 = vector.shape_cast %38 : vector<8xf32> to vector<8x1xf32>
    %40 = tpu.reciprocal %39 {approx = true} : vector<8x1xf32> -> vector<8x1xf32>
    %41 = vector.broadcast %40 : vector<8x1xf32> to vector<8x2xf32>
    %42 = arith.mulf %37, %41 : vector<8x2xf32>
    %c0_18 = arith.constant 0 : index
    %c0_19 = arith.constant 0 : index
    %43 = vector.load %arg3[%c0_18, %c0_19] : memref<8x2xf32, #tpu.memory_space<vmem>>, vector<8x2xf32>
    tpu.vector_store %arg3[%c0_18, %c0_19], %42 {strides = array<i32>} : memref<8x2xf32, #tpu.memory_space<vmem>>, vector<8x2xf32>,
    return
  }
  func.func @transform_0(%arg0: i32) -> (i32, i32) {
    %c0_i32 = arith.constant 0 : i32
    %c0_i32_0 = arith.constant 0 : i32
    return %arg0, %c0_i32 : i32, i32
  }
  func.func @transform_1(%arg0: i32) -> (i32, i32) {
    %c0_i32 = arith.constant 0 : i32
    %c0_i32_0 = arith.constant 0 : i32
    %c0_i32_1 = arith.constant 0 : i32
    return %c0_i32, %c0_i32_0 : i32, i32
  }
  func.func @transform_2(%arg0: i32) -> (i32, i32) {
    %c0_i32 = arith.constant 0 : i32
    %c0_i32_0 = arith.constant 0 : i32
    return %arg0, %c0_i32 : i32, i32
  }
}

</mosaic_0001>

<llo_original>
// kernel: limited_forward.1
$region0: #{limited_forward.1}
  #allocation0 [shape = 'u32[]', space=smem, size = 0x4, offset = 0x4, fixed_abs, tag = 'smem constant byte address 0x4 - core index']
  #allocation1 [shape = 'u32[144,128]{1,0:T(1,128)}', space=vmem, size = 0x12000, scoped, tag = 'internal scratch']
  %s0 = inlined_call_operand.vmem [shape: f32[8,256], index: 0, kind: input, shape index: {}]
  %s1 = inlined_call_operand.vmem [shape: f32[376,128], index: 1, kind: input, shape index: {}]
  %s2 = inlined_call_operand.vmem [shape: f32[8,2], index: 2, kind: output, shape index: {}]
  %s3 = sld [smem:[#allocation0]]
  $region18: #{limited_forward.1} parent=0
    _
  %s5 = ssub.s32 1, %s3
  %s6 = scalar_select 0, %s5, %s3
  // Predicated region
  $region2: #{limited_forward.1} parent=0 // pred_check
    _
  $region3: #{limited_forward.1} parent=0 // pred_check_branch
    %8 = sbr.rel (0) target = $region5
  $region4: #{limited_forward.1} parent=0 // pred_region
    _
  $region5: #{limited_forward.1} parent=0 // pred_fallthru
    _
  // Predicated region
  $region6: #{limited_forward.1} parent=0 // pred_check
    _
  $region7: #{limited_forward.1} parent=0 // pred_check_branch
    %10 = sbr.rel (0) target = $region9
  $region8: #{limited_forward.1} parent=0 // pred_region
    _
  $region9: #{limited_forward.1} parent=0 // pred_fallthru
    _
  %v11 = vld [vmem:[%s0] sm:$0xff]
  %v12 = vld [vmem:[%s0 + $0x8] sm:$0xff]
  %v13 = vld [vmem:[%s1] sm:$0xff]
  %v14 = vld [vmem:[%s1 + $0x8] sm:$0xff]
  %v15 = vld [vmem:[%s1 + $0x10] sm:$0xff]
  %v16 = vld [vmem:[%s1 + $0x18] sm:$0xff]
  %v17 = vld [vmem:[%s1 + $0x20] sm:$0xff]
  %v18 = vld [vmem:[%s1 + $0x28] sm:$0xff]
  %v19 = vld [vmem:[%s1 + $0x30] sm:$0xff]
  %v20 = vld [vmem:[%s1 + $0x38] sm:$0xff]
  %v21 = vld [vmem:[%s1 + $0x40] sm:$0xff]
  %v22 = vld [vmem:[%s1 + $0x48] sm:$0xff]
  %v23 = vld [vmem:[%s1 + $0x50] sm:$0xff]
  %v24 = vld [vmem:[%s1 + $0x58] sm:$0xff]
  %v25 = vld [vmem:[%s1 + $0x60] sm:$0xff]
  %v26 = vld [vmem:[%s1 + $0x68] sm:$0xff]
  %v27 = vld [vmem:[%s1 + $0x70] sm:$0xff]
  %v28 = vld [vmem:[%s1 + $0x78] sm:$0xff]
  %v29 = vld [vmem:[%s1 + $0x80] sm:$0xff]
  %v30 = vld [vmem:[%s1 + $0x88] sm:$0xff]
  %v31 = vld [vmem:[%s1 + $0x90] sm:$0xff]
  %v32 = vld [vmem:[%s1 + $0x98] sm:$0xff]
  %v33 = vld [vmem:[%s1 + $0xa0] sm:$0xff]
  %v34 = vld [vmem:[%s1 + $0xa8] sm:$0xff]
  %v35 = vld [vmem:[%s1 + $0xb0] sm:$0xff]
  %v36 = vld [vmem:[%s1 + $0xb8] sm:$0xff]
  %v37 = vld [vmem:[%s1 + $0xc0] sm:$0xff]
  %v38 = vld [vmem:[%s1 + $0xc8] sm:$0xff]
  %v39 = vld [vmem:[%s1 + $0xd0] sm:$0xff]
  %v40 = vld [vmem:[%s1 + $0xd8] sm:$0xff]
  %v41 = vld [vmem:[%s1 + $0xe0] sm:$0xff]
  %v42 = vld [vmem:[%s1 + $0xe8] sm:$0xff]
  %v43 = vld [vmem:[%s1 + $0xf0] sm:$0xff]
  %v44 = vld [vmem:[%s1 + $0xf8] sm:$0xff]
  %v45 = vld [vmem:[%s1 + $0x170] sm:$0x1]
  %v46 = vlaneseq
  %v47 = vshrl.u32 %v46, 7
  %v48 = vsub.s32 0, %v47
  %v49 = vrot.slane %v45, %v48
  %50 = vmatprep.subr.mxu0 0.0
  %51 = vmatpush1.msra.mxu0 %v13
  %52 = vmatprep.subr.mxu0 0.0
  %53 = vmatpush1.msra.mxu0 %v14
  %54 = vmatprep.subr.mxu0 0.0
  %55 = vmatpush1.msra.mxu0 %v15
  %56 = vmatprep.subr.mxu0 0.0
  %57 = vmatpush1.msra.mxu0 %v16
  %58 = vmatprep.subr.mxu0 0.0
  %59 = vmatpush1.msra.mxu0 %v17
  %60 = vmatprep.subr.mxu0 0.0
  %61 = vmatpush1.msra.mxu0 %v18
  %62 = vmatprep.subr.mxu0 0.0
  %63 = vmatpush1.msra.mxu0 %v19
  %64 = vmatprep.subr.mxu0 0.0
  %65 = vmatpush1.msra.mxu0 %v20
  %66 = vmatprep.subr.mxu0 0.0
  %67 = vmatpush1.msra.mxu0 %v21
  %68 = vmatprep.subr.mxu0 0.0
  %69 = vmatpush1.msra.mxu0 %v22
  %70 = vmatprep.subr.mxu0 0.0
  %71 = vmatpush1.msra.mxu0 %v23
  %72 = vmatprep.subr.mxu0 0.0
  %73 = vmatpush1.msra.mxu0 %v24
  %74 = vmatprep.subr.mxu0 0.0
  %75 = vmatpush1.msra.mxu0 %v25
  %76 = vmatprep.subr.mxu0 0.0
  %77 = vmatpush1.msra.mxu0 %v26
  %78 = vmatprep.subr.mxu0 0.0
  %79 = vmatpush1.msra.mxu0 %v27
  %80 = vmatprep.subr.mxu0 0.0
  %81 = vmatpush1.msra.mxu0 %v28
  %82 = vmatprep.subr.mxu0 0.0
  %83 = vmatpush1.msra.mxu0 %v29
  %84 = vmatprep.subr.mxu0 0.0
  %85 = vmatpush1.msra.mxu0 %v30
  %86 = vmatprep.subr.mxu0 0.0
  %87 = vmatpush1.msra.mxu0 %v31
  %88 = vmatprep.subr.mxu0 0.0
  %89 = vmatpush1.msra.mxu0 %v32
  %90 = vmatprep.subr.mxu0 0.0
  %91 = vmatpush1.msra.mxu0 %v33
  %92 = vmatprep.subr.mxu0 0.0
  %93 = vmatpush1.msra.mxu0 %v34
  %94 = vmatprep.subr.mxu0 0.0
  %95 = vmatpush1.msra.mxu0 %v35
  %96 = vmatprep.subr.mxu0 0.0
  %97 = vmatpush1.msra.mxu0 %v36
  %98 = vmatprep.subr.mxu0 0.0
  %99 = vmatpush1.msra.mxu0 %v37
  %100 = vmatprep.subr.mxu0 0.0
  %101 = vmatpush1.msra.mxu0 %v38
  %102 = vmatprep.subr.mxu0 0.0
  %103 = vmatpush1.msra.mxu0 %v39
  %104 = vmatprep.subr.mxu0 0.0
  %105 = vmatpush1.msra.mxu0 %v40
  %106 = vmatprep.subr.mxu0 0.0
  %107 = vmatpush1.msra.mxu0 %v41
  %108 = vmatprep.subr.mxu0 0.0
  %109 = vmatpush1.msra.mxu0 %v42
  %110 = vmatprep.subr.mxu0 0.0
  %111 = vmatpush1.msra.mxu0 %v43
  %112 = vmatprep.subr.mxu0 0.0
  %113 = vmatpush1.msra.mxu0 %v44
  %114 = vmatprep.mubr.f32.mxu0 %v12
  %115 = vmatmul.mubr.f32.gmra.mrb[0].mxu0 %v11
  %v116 = vpop.f32.mrb[0].mxu0
  %v117 = vadd.f32 %v49, %v116
  %v118 = vpop.f32.mrb[0].mxu0
  %119 = vdwg.mxu0
  %v120 = vmax.f32 %v117, 0.0
  %122 = vrot.lane.b32.xlu0 %v120, 64
  %v123 = vpop.permute.xlu0 %122
  %v125 = vmax.f32 %v120, %v123
  %v126 = vld [vmem:[%s1 + $0x100] sm:$0xff]
  %v127 = vld [vmem:[%s1 + $0x108] sm:$0xff]
  %v128 = vld [vmem:[%s1 + $0x110] sm:$0xff]
  %v129 = vld [vmem:[%s1 + $0x118] sm:$0xff]
  %v130 = vld [vmem:[%s1 + $0x120] sm:$0xff]
  %v131 = vld [vmem:[%s1 + $0x128] sm:$0xff]
  %v132 = vld [vmem:[%s1 + $0x130] sm:$0xff]
  %v133 = vld [vmem:[%s1 + $0x138] sm:$0xff]
  %v134 = vld [vmem:[%s1 + $0x171] sm:$0x1]
  %v135 = vlaneseq
  %v136 = vshrl.u32 %v135, 7
  %v137 = vsub.s32 0, %v136
  %v138 = vrot.slane %v134, %v137
  %vm139 = vcmask 523264
  %v141 = vsel %vm139, %v125, 0
  %143 = vmatprep.subr.mxu0 0.0
  %144 = vmatpush1.msra.mxu0 %v126
  %145 = vmatprep.subr.mxu0 0.0
  %146 = vmatpush1.msra.mxu0 %v127
  %147 = vmatprep.subr.mxu0 0.0
  %148 = vmatpush1.msra.mxu0 %v128
  %149 = vmatprep.subr.mxu0 0.0
  %150 = vmatpush1.msra.mxu0 %v129
  %151 = vmatprep.subr.mxu0 0.0
  %152 = vmatpush1.msra.mxu0 %v130
  %153 = vmatprep.subr.mxu0 0.0
  %154 = vmatpush1.msra.mxu0 %v131
  %155 = vmatprep.subr.mxu0 0.0
  %156 = vmatpush1.msra.mxu0 %v132
  %157 = vmatprep.subr.mxu0 0.0
  %158 = vmatpush1.msra.mxu0 %v133
  %159 = vmatprep.subr.mxu0 0.0
  %160 = vmatpush1.msra.mxu0 0.0
  %161 = vmatprep.subr.mxu0 0.0
  %162 = vmatpush1.msra.mxu0 0.0
  %163 = vmatprep.subr.mxu0 0.0
  %164 = vmatpush1.msra.mxu0 0.0
  %165 = vmatprep.subr.mxu0 0.0
  %166 = vmatpush1.msra.mxu0 0.0
  %167 = vmatprep.subr.mxu0 0.0
  %168 = vmatpush1.msra.mxu0 0.0
  %169 = vmatprep.subr.mxu0 0.0
  %170 = vmatpush1.msra.mxu0 0.0
  %171 = vmatprep.subr.mxu0 0.0
  %172 = vmatpush1.msra.mxu0 0.0
  %173 = vmatprep.subr.mxu0 0.0
  %174 = vmatpush1.msra.mxu0 0.0
  %175 = vmatprep.subr.mxu0 0.0
  %176 = vmatpush1.msra.mxu0 0.0
  %177 = vmatprep.subr.mxu0 0.0
  %178 = vmatpush1.msra.mxu0 0.0
  %179 = vmatprep.subr.mxu0 0.0
  %180 = vmatpush1.msra.mxu0 0.0
  %181 = vmatprep.subr.mxu0 0.0
  %182 = vmatpush1.msra.mxu0 0.0
  %183 = vmatprep.subr.mxu0 0.0
  %184 = vmatpush1.msra.mxu0 0.0
  %185 = vmatprep.subr.mxu0 0.0
  %186 = vmatpush1.msra.mxu0 0.0
  %187 = vmatprep.subr.mxu0 0.0
  %188 = vmatpush1.msra.mxu0 0.0
  %189 = vmatprep.subr.mxu0 0.0
  %190 = vmatpush1.msra.mxu0 0.0
  %191 = vmatprep.subr.mxu0 0.0
  %192 = vmatpush1.msra.mxu0 0.0
  %193 = vmatprep.subr.mxu0 0.0
  %194 = vmatpush1.msra.mxu0 0.0
  %195 = vmatprep.subr.mxu0 0.0
  %196 = vmatpush1.msra.mxu0 0.0
  %197 = vmatprep.subr.mxu0 0.0
  %198 = vmatpush1.msra.mxu0 0.0
  %199 = vmatprep.subr.mxu0 0.0
  %200 = vmatpush1.msra.mxu0 0.0
  %201 = vmatprep.subr.mxu0 0.0
  %202 = vmatpush1.msra.mxu0 0.0
  %203 = vmatprep.subr.mxu0 0.0
  %204 = vmatpush1.msra.mxu0 0.0
  %205 = vmatprep.subr.mxu0 0.0
  %206 = vmatpush1.msra.mxu0 0.0
  %207 = vmatprep.mubr.f32.mxu0 0.0
  %208 = vmatmul.mubr.f32.gmra.mrb[0].mxu0 %v141
  %v209 = vpop.f32.mrb[0].mxu0
  %v210 = vadd.f32 %v138, %v209
  %v211 = vpop.f32.mrb[0].mxu0
  %212 = vdwg.mxu0
  %v213 = vmax.f32 %v210, 0.0
  %215 = vrot.lane.b32.xlu0 %v213, 112
  %v216 = vpop.permute.xlu0 %215
  %v218 = vmax.f32 %v213, %v216
  %v219 = vld [vmem:[%s1 + $0x140] sm:$0xff]
  %v220 = vld [vmem:[%s1 + $0x148] sm:$0xff]
  %v221 = vld [vmem:[%s1 + $0x172] sm:$0x1]
  %v222 = vlaneseq
  %v223 = vshrl.u32 %v222, 7
  %v224 = vsub.s32 0, %v223
  %v225 = vrot.slane %v221, %v224
  %vm226 = vcmask 130048
  %v228 = vsel %vm226, %v218, 0
  %230 = vmatprep.subr.mxu0 0.0
  %231 = vmatpush1.msra.mxu0 %v219
  %232 = vmatprep.subr.mxu0 0.0
  %233 = vmatpush1.msra.mxu0 %v220
  %234 = vmatprep.subr.mxu0 0.0
  %235 = vmatpush1.msra.mxu0 0.0
  %236 = vmatprep.subr.mxu0 0.0
  %237 = vmatpush1.msra.mxu0 0.0
  %238 = vmatprep.subr.mxu0 0.0
  %239 = vmatpush1.msra.mxu0 0.0
  %240 = vmatprep.subr.mxu0 0.0
  %241 = vmatpush1.msra.mxu0 0.0
  %242 = vmatprep.subr.mxu0 0.0
  %243 = vmatpush1.msra.mxu0 0.0
  %244 = vmatprep.subr.mxu0 0.0
  %245 = vmatpush1.msra.mxu0 0.0
  %246 = vmatprep.subr.mxu0 0.0
  %247 = vmatpush1.msra.mxu0 0.0
  %248 = vmatprep.subr.mxu0 0.0
  %249 = vmatpush1.msra.mxu0 0.0
  %250 = vmatprep.subr.mxu0 0.0
  %251 = vmatpush1.msra.mxu0 0.0
  %252 = vmatprep.subr.mxu0 0.0
  %253 = vmatpush1.msra.mxu0 0.0
  %254 = vmatprep.subr.mxu0 0.0
  %255 = vmatpush1.msra.mxu0 0.0
  %256 = vmatprep.subr.mxu0 0.0
  %257 = vmatpush1.msra.mxu0 0.0
  %258 = vmatprep.subr.mxu0 0.0
  %259 = vmatpush1.msra.mxu0 0.0
  %260 = vmatprep.subr.mxu0 0.0
  %261 = vmatpush1.msra.mxu0 0.0
  %262 = vmatprep.subr.mxu0 0.0
  %263 = vmatpush1.msra.mxu0 0.0
  %264 = vmatprep.subr.mxu0 0.0
  %265 = vmatpush1.msra.mxu0 0.0
  %266 = vmatprep.subr.mxu0 0.0
  %267 = vmatpush1.msra.mxu0 0.0
  %268 = vmatprep.subr.mxu0 0.0
  %269 = vmatpush1.msra.mxu0 0.0
  %270 = vmatprep.subr.mxu0 0.0
  %271 = vmatpush1.msra.mxu0 0.0
  %272 = vmatprep.subr.mxu0 0.0
  %273 = vmatpush1.msra.mxu0 0.0
  %274 = vmatprep.subr.mxu0 0.0
  %275 = vmatpush1.msra.mxu0 0.0
  %276 = vmatprep.subr.mxu0 0.0
  %277 = vmatpush1.msra.mxu0 0.0
  %278 = vmatprep.subr.mxu0 0.0
  %279 = vmatpush1.msra.mxu0 0.0
  %280 = vmatprep.subr.mxu0 0.0
  %281 = vmatpush1.msra.mxu0 0.0
  %282 = vmatprep.subr.mxu0 0.0
  %283 = vmatpush1.msra.mxu0 0.0
  %284 = vmatprep.subr.mxu0 0.0
  %285 = vmatpush1.msra.mxu0 0.0
  %286 = vmatprep.subr.mxu0 0.0
  %287 = vmatpush1.msra.mxu0 0.0
  %288 = vmatprep.subr.mxu0 0.0
  %289 = vmatpush1.msra.mxu0 0.0
  %290 = vmatprep.subr.mxu0 0.0
  %291 = vmatpush1.msra.mxu0 0.0
  %292 = vmatprep.subr.mxu0 0.0
  %293 = vmatpush1.msra.mxu0 0.0
  %294 = vmatprep.mubr.f32.mxu0 0.0
  %295 = vmatmul.mubr.f32.gmra.mrb[0].mxu0 %v228
  %v296 = vpop.f32.mrb[0].mxu0
  %v297 = vadd.f32 %v225, %v296
  %v298 = vpop.f32.mrb[0].mxu0
  %299 = vdwg.mxu0
  %v300 = vmax.f32 %v297, 0.0
  %v301 = vld [vmem:[%s1 + $0x150] sm:$0xff]
  %v302 = vld [vmem:[%s1 + $0x158] sm:$0xff]
  %v303 = vld [vmem:[%s1 + $0x160] sm:$0xff]
  %v304 = vld [vmem:[%s1 + $0x168] sm:$0xff]
  %v305 = vld [vmem:[%s1 + $0x173] sm:$0x1]
  %v306 = vlaneseq
  %v307 = vshrl.u32 %v306, 7
  %v308 = vsub.s32 0, %v307
  %v309 = vrot.slane %v305, %v308
  %vm310 = vcmask 261120
  %v312 = vsel %vm310, %v300, 0
  %314 = vmatprep.subr.mxu0 0.0
  %315 = vmatpush1.msra.mxu0 %v301
  %316 = vmatprep.subr.mxu0 0.0
  %317 = vmatpush1.msra.mxu0 %v302
  %318 = vmatprep.subr.mxu0 0.0
  %319 = vmatpush1.msra.mxu0 %v303
  %320 = vmatprep.subr.mxu0 0.0
  %321 = vmatpush1.msra.mxu0 %v304
  %322 = vmatprep.subr.mxu0 0.0
  %323 = vmatpush1.msra.mxu0 0.0
  %324 = vmatprep.subr.mxu0 0.0
  %325 = vmatpush1.msra.mxu0 0.0
  %326 = vmatprep.subr.mxu0 0.0
  %327 = vmatpush1.msra.mxu0 0.0
  %328 = vmatprep.subr.mxu0 0.0
  %329 = vmatpush1.msra.mxu0 0.0
  %330 = vmatprep.subr.mxu0 0.0
  %331 = vmatpush1.msra.mxu0 0.0
  %332 = vmatprep.subr.mxu0 0.0
  %333 = vmatpush1.msra.mxu0 0.0
  %334 = vmatprep.subr.mxu0 0.0
  %335 = vmatpush1.msra.mxu0 0.0
  %336 = vmatprep.subr.mxu0 0.0
  %337 = vmatpush1.msra.mxu0 0.0
  %338 = vmatprep.subr.mxu0 0.0
  %339 = vmatpush1.msra.mxu0 0.0
  %340 = vmatprep.subr.mxu0 0.0
  %341 = vmatpush1.msra.mxu0 0.0
  %342 = vmatprep.subr.mxu0 0.0
  %343 = vmatpush1.msra.mxu0 0.0
  %344 = vmatprep.subr.mxu0 0.0
  %345 = vmatpush1.msra.mxu0 0.0
  %346 = vmatprep.subr.mxu0 0.0
  %347 = vmatpush1.msra.mxu0 0.0
  %348 = vmatprep.subr.mxu0 0.0
  %349 = vmatpush1.msra.mxu0 0.0
  %350 = vmatprep.subr.mxu0 0.0
  %351 = vmatpush1.msra.mxu0 0.0
  %352 = vmatprep.subr.mxu0 0.0
  %353 = vmatpush1.msra.mxu0 0.0
  %354 = vmatprep.subr.mxu0 0.0
  %355 = vmatpush1.msra.mxu0 0.0
  %356 = vmatprep.subr.mxu0 0.0
  %357 = vmatpush1.msra.mxu0 0.0
  %358 = vmatprep.subr.mxu0 0.0
  %359 = vmatpush1.msra.mxu0 0.0
  %360 = vmatprep.subr.mxu0 0.0
  %361 = vmatpush1.msra.mxu0 0.0
  %362 = vmatprep.subr.mxu0 0.0
  %363 = vmatpush1.msra.mxu0 0.0
  %364 = vmatprep.subr.mxu0 0.0
  %365 = vmatpush1.msra.mxu0 0.0
  %366 = vmatprep.subr.mxu0 0.0
  %367 = vmatpush1.msra.mxu0 0.0
  %368 = vmatprep.subr.mxu0 0.0
  %369 = vmatpush1.msra.mxu0 0.0
  %370 = vmatprep.subr.mxu0 0.0
  %371 = vmatpush1.msra.mxu0 0.0
  %372 = vmatprep.subr.mxu0 0.0
  %373 = vmatpush1.msra.mxu0 0.0
  %374 = vmatprep.subr.mxu0 0.0
  %375 = vmatpush1.msra.mxu0 0.0
  %376 = vmatprep.subr.mxu0 0.0
  %377 = vmatpush1.msra.mxu0 0.0
  %378 = vmatprep.mubr.f32.mxu0 0.0
  %379 = vmatmul.mubr.f32.gmra.mrb[0].mxu0 %v312
  %v380 = vpop.f32.mrb[0].mxu0
  %v381 = vadd.f32 %v309, %v380
  %v382 = vpop.f32.mrb[0].mxu0
  %383 = vdwg.mxu0
  %vm384 = vcmask 15360
  %v385 = vsel %vm384, %v381, -inf
  %386 = vmax.xlane.f32.xlu0 %v385
  %v387 = vpop.xlane.xlu0 %386
  %v388 = vsub.f32 %v381, %v387
  %v389 = vmul.f32 %v388, 1.442695
  %v390 = vpow.pop %v389
  %v391 = vsel %vm384, %v390, 0.0
  %392 = vadd.xlane.f32.xlu0 %v391
  %v393 = vpop.xlane.xlu0 %392
  %v394 = vrcp.pop %v393
  %v395 = vmul.f32 %v390, %v394
  %396 = vst.msk [vmem:[%s2] sm:$0xff] %vm384, %v395
  // Predicated region
  $region10: #{limited_forward.1} parent=0 // pred_check
    _
  $region11: #{limited_forward.1} parent=0 // pred_check_branch
    %398 = sbr.rel (0) target = $region13
  $region12: #{limited_forward.1} parent=0 // pred_region
    _
  $region13: #{limited_forward.1} parent=0 // pred_fallthru
    _
  // Predicated region
  $region14: #{limited_forward.1} parent=0 // pred_check
    _
  $region15: #{limited_forward.1} parent=0 // pred_check_branch
    %400 = sbr.rel (0) target = $region17
  $region16: #{limited_forward.1} parent=0 // pred_region
    _
  $region17: #{limited_forward.1} parent=0 // pred_fallthru
    _

</llo_original>
